<compile_context>
chip_gen: v5e
topology: v5e:2x2
jax: 0.10.0
libtpu: 0.0.40
codegen_flags: <defaults>
</compile_context>

<pallas_src>
import jax
import jax.numpy as jnp
from jax.experimental import pallas as pl
from jax.experimental.pallas import tpu as pltpu


def _round_up(x, m):
    return (x + m - 1) // m * m


def _residual_linear_kernel(x_ref, w_ref, b_ref, o_ref):
    """o = fn(x) + x  with  fn(x) = x @ W + b   (one [TM, Dp] tile)."""
    x = x_ref[...]                                        # load once, reuse for residual
    y = jnp.dot(x, w_ref[...],                            # MXU matmul, f32 accumulate
                preferred_element_type=jnp.float32)
    y = y + b_ref[...].astype(jnp.float32)                # bias broadcast [1, Dp]
    o_ref[...] = (y + x.astype(jnp.float32)).astype(o_ref.dtype)   # residual add, cast once


def residual_forward(x, w, b, *, tm=256):
    """Residual(Linear) forward: returns x @ W + b + x.

    x: [B, S, D]   w: [D, D]   b: [D]
    """
    B, S, D = x.shape
    M = B * S

    # Lane-dense hidden dim (multiple of 128) and sublane-aligned token tile
    # (multiple of 8).  Real ViT D (768, 1024, ...) pads to itself.
    Dp = _round_up(D, 128)
    TM = min(tm, _round_up(M, 8))
    Mp = _round_up(M, TM)

    # Glue: flatten tokens and zero-pad (plain JAX).  Zero padding is exact:
    # padded rows/cols of W and b are zero, so fn(x)+x is zero there too.
    x2 = x.reshape(M, D)
    x2 = jnp.pad(x2, ((0, Mp - M), (0, Dp - D)))
    w2 = jnp.pad(w, ((0, Dp - D), (0, Dp - D)))
    b2 = jnp.pad(b, (0, Dp - D)).reshape(1, Dp)

    out = pl.pallas_call(
        _residual_linear_kernel,
        out_shape=jax.ShapeDtypeStruct((Mp, Dp), x.dtype),
        grid_spec=pl.GridSpec(
            grid=(Mp // TM,),
            in_specs=[
                pl.BlockSpec((TM, Dp), lambda i: (i, 0)),   # x tile (pipelined)
                pl.BlockSpec((Dp, Dp), lambda i: (0, 0)),   # W, block-resident
                pl.BlockSpec((1, Dp),  lambda i: (0, 0)),   # bias, block-resident
            ],
            out_specs=pl.BlockSpec((TM, Dp), lambda i: (i, 0)),
        ),
        compiler_params=pltpu.CompilerParams(
            dimension_semantics=("parallel",)),             # megacore shard on v7x
    )(x2, w2, b2)

    return out[:M, :D].reshape(B, S, D)

# TODO(synk): Residual.fn is an arbitrary wrapped module in PyTorch; only the
# Linear(D, D) instantiation is fused here.  For very large D (e.g. the MLP
# branch) add a K reduction grid axis with a VMEM f32 accumulator.


if __name__ == "__main__":
    # Small ViT-like shapes: batch=2, seq=8, hidden=32.
    B, S, D = 2, 8, 32
    key = jax.random.PRNGKey(0)
    kx, kw, kb = jax.random.split(key, 3)

    x = jax.random.normal(kx, (B, S, D), dtype=jnp.float32)
    # Deterministic synthetic parameters for fn = Linear(D, D).
    w = jax.random.normal(kw, (D, D), dtype=jnp.float32) * (1.0 / jnp.sqrt(D))
    b = jax.random.normal(kb, (D,), dtype=jnp.float32) * 0.02

    out = residual_forward(x, w, b)
    jax.block_until_ready(out)

    # Pure-JAX reference check of Residual semantics: fn(x) + x.
    ref = jnp.einsum("bsd,de->bse", x, w) + b + x
    assert out.shape == x.shape and out.dtype == x.dtype
    assert jnp.allclose(out, ref, atol=1e-4, rtol=1e-4), "mismatch vs reference"

    print("KERNEL_OK")
</pallas_src>

<mosaic_0001>
module attributes {stable_mosaic.version = 11 : i64} {
  func.func @_residual_linear_kernel(%arg0: i32, %arg1: memref<16x128xf32, #tpu.memory_space<vmem>>, %arg2: memref<128x128xf32, #tpu.memory_space<vmem>>, %arg3: memref<1x128xf32, #tpu.memory_space<vmem>>, %arg4: memref<16x128xf32, #tpu.memory_space<vmem>>) attributes {dimension_semantics = [#tpu.dimension_semantics<parallel>], iteration_bounds = array<i64: 1>, scalar_prefetch = 0 : i64, scratch_operands = 0 : i64, tpu.core_type = #tpu.core_type<tc>, window_params = [{transform_indices = @transform_0, window_bounds = array<i64: 16, 128>}, {pipeline_mode = #tpu.pipeline_mode<synchronous>, transform_indices = @transform_1, window_bounds = array<i64: 128, 128>}, {pipeline_mode = #tpu.pipeline_mode<synchronous>, transform_indices = @transform_2, window_bounds = array<i64: 1, 128>}, {transform_indices = @transform_3, window_bounds = array<i64: 16, 128>}]} {
    %c0 = arith.constant 0 : index
    %c0_0 = arith.constant 0 : index
    %0 = vector.load %arg1[%c0, %c0_0] : memref<16x128xf32, #tpu.memory_space<vmem>>, vector<16x128xf32>
    %c0_1 = arith.constant 0 : index
    %c0_2 = arith.constant 0 : index
    %1 = vector.load %arg2[%c0_1, %c0_2] : memref<128x128xf32, #tpu.memory_space<vmem>>, vector<128x128xf32>
    %cst = arith.constant dense<0.000000e+00> : vector<16x128xf32>
    %2 = tpu.matmul %0, %1, %cst {dimension_numbers = #tpu.dot_dimension_numbers<[1], [0], [0], [1], [0, 0, 1, 1], [], []>} : vector<16x128xf32>, vector<128x128xf32>, vector<16x128xf32> -> vector<16x128xf32>
    %c0_3 = arith.constant 0 : index
    %c0_4 = arith.constant 0 : index
    %3 = vector.load %arg3[%c0_3, %c0_4] : memref<1x128xf32, #tpu.memory_space<vmem>>, vector<1x128xf32>
    %4 = vector.broadcast %3 : vector<1x128xf32> to vector<16x128xf32>
    %5 = arith.addf %2, %4 : vector<16x128xf32>
    %6 = arith.addf %5, %0 : vector<16x128xf32>
    %c0_5 = arith.constant 0 : index
    %c0_6 = arith.constant 0 : index
    %7 = vector.load %arg4[%c0_5, %c0_6] : memref<16x128xf32, #tpu.memory_space<vmem>>, vector<16x128xf32>
    tpu.vector_store %arg4[%c0_5, %c0_6], %6 {strides = array<i32>} : memref<16x128xf32, #tpu.memory_space<vmem>>, vector<16x128xf32>,
    return
  }
  func.func @transform_0(%arg0: i32) -> (i32, i32) {
    %c0_i32 = arith.constant 0 : i32
    %c0_i32_0 = arith.constant 0 : i32
    return %arg0, %c0_i32 : i32, i32
  }
  func.func @transform_1(%arg0: i32) -> (i32, i32) {
    %c0_i32 = arith.constant 0 : i32
    %c0_i32_0 = arith.constant 0 : i32
    %c0_i32_1 = arith.constant 0 : i32
    return %c0_i32, %c0_i32_0 : i32, i32
  }
  func.func @transform_2(%arg0: i32) -> (i32, i32) {
    %c0_i32 = arith.constant 0 : i32
    %c0_i32_0 = arith.constant 0 : i32
    %c0_i32_1 = arith.constant 0 : i32
    return %c0_i32, %c0_i32_0 : i32, i32
  }
  func.func @transform_3(%arg0: i32) -> (i32, i32) {
    %c0_i32 = arith.constant 0 : i32
    %c0_i32_0 = arith.constant 0 : i32
    return %arg0, %c0_i32 : i32, i32
  }
}

</mosaic_0001>

<llo_original>
// kernel: tpu_custom_call.1
$region0: #{tpu_custom_call.1}
  #allocation0 [shape = 'u32[]', space=smem, size = 0x4, offset = 0x4, fixed_abs, tag = 'smem constant byte address 0x4 - core index']
  #allocation1 [shape = 'u32[72,128]{1,0:T(1,128)}', space=vmem, size = 0x9000, scoped, tag = 'internal scratch']
  %s0 = inlined_call_operand.hbm [shape: f32[16,128], index: 0, kind: input, shape index: {}]
  %s1 = inlined_call_operand.hbm [shape: f32[128,128], index: 1, kind: input, shape index: {}]
  %s2 = inlined_call_operand.vmem [shape: f32[1,128], index: 2, kind: input, shape index: {}]
  %s3 = inlined_call_operand.hbm [shape: f32[16,128], index: 3, kind: output, shape index: {}]
  %s4 = sld [smem:[#allocation0]]
  $region30: #{tpu_custom_call.1} parent=0
    _
  %s6 = ssub.s32 1, %s4
  %s7 = scalar_select 0, %s6, %s4
  $region1: #{tpu_custom_call.1} parent=0
    #allocation2 [shape = 'u8[8192]{0}', space=vmem, size = 0x2000, scoped, tag = 'input window, operand 0, single buffered']
    #allocation3 [shape = 's32[1]{0}', space=sflag, size = 0x4, scoped, tag = 'scoped memory for tpu_custom_call.1']
    #allocation4 [shape = 's32[1]{0}', space=sflag, size = 0x4, scoped, tag = 'scoped memory for tpu_custom_call.1']
    #allocation5 [shape = 'u8[65536]{0}', space=vmem, size = 0x10000, scoped, tag = 'input window, operand 1, single buffered']
    #allocation6 [shape = 's32[1]{0}', space=sflag, size = 0x4, scoped, tag = 'scoped memory for tpu_custom_call.1']
    #allocation7 [shape = 'u8[8192]{0}', space=vmem, size = 0x2000, scoped, tag = 'output window, operand 0, single buffered']
    %8 = vsyncpa [#allocation3], 0
    %9 = vsyncpa [#allocation6], 0
    %10 = vsyncpa [#allocation4], 0
    // Predicated region
    $region2: #{tpu_custom_call.1} parent=1 // pred_check
      _
    $region3: #{tpu_custom_call.1} parent=1 // pred_check_branch
      %12 = sbr.rel (0) target = $region5
    $region4: #{tpu_custom_call.1} parent=1 // pred_region
      %14 = vsyncadd [#allocation3], 0
      %s15 = sshll.u32 %s0, 4
      %s16 = int_to_ptr.hbm [resolvable:$true] %s15
      %s17 = sshll.u32 [#allocation2], 4
      %s18 = int_to_ptr.vmem [resolvable:$true] %s17
      %23 = dma.hbm_to_vmem [thread:$0]  %s16, 256, %s18, [#allocation3], 128, 128, 8
    $region5: #{tpu_custom_call.1} parent=1 // pred_fallthru
      _
    // Predicated region
    $region6: #{tpu_custom_call.1} parent=1 // pred_check
      _
    $region7: #{tpu_custom_call.1} parent=1 // pred_check_branch
      %25 = sbr.rel (0) target = $region9
    $region8: #{tpu_custom_call.1} parent=1 // pred_region
      %27 = vsyncadd [#allocation6], 0
      %s28 = sshll.u32 %s1, 4
      %s29 = int_to_ptr.hbm [resolvable:$true] %s28
      %s30 = sshll.u32 [#allocation5], 4
      %s31 = int_to_ptr.vmem [resolvable:$true] %s30
      %36 = dma.hbm_to_vmem [thread:$0]  %s29, 2048, %s31, [#allocation6], 128, 128, 8
    $region9: #{tpu_custom_call.1} parent=1 // pred_fallthru
      _
    // Predicated region
    $region10: #{tpu_custom_call.1} parent=1 // pred_check
      _
    $region11: #{tpu_custom_call.1} parent=1 // pred_check_branch
      %38 = sbr.rel (0) target = $region13
    $region12: #{tpu_custom_call.1} parent=1 // pred_region
      _
    $region13: #{tpu_custom_call.1} parent=1 // pred_fallthru
      _
    // Predicated region
    $region14: #{tpu_custom_call.1} parent=1 // pred_check
      _
    $region15: #{tpu_custom_call.1} parent=1 // pred_check_branch
      %40 = sbr.rel (0) target = $region17
    $region16: #{tpu_custom_call.1} parent=1 // pred_region
      %42 = dma.done [#allocation3], 256
    $region17: #{tpu_custom_call.1} parent=1 // pred_fallthru
      _
    // Predicated region
    $region18: #{tpu_custom_call.1} parent=1 // pred_check
      _
    $region19: #{tpu_custom_call.1} parent=1 // pred_check_branch
      %44 = sbr.rel (0) target = $region21
    $region20: #{tpu_custom_call.1} parent=1 // pred_region
      %46 = dma.done [#allocation6], 2048
    $region21: #{tpu_custom_call.1} parent=1 // pred_fallthru
      _
    %v47 = vld [vmem:[#allocation2] sm:$0xff]
    %v48 = vld [vmem:[#allocation2 + $0x8] sm:$0xff]
    %v49 = vld [vmem:[#allocation5] sm:$0xff]
    %v50 = vld [vmem:[#allocation5 + $0x8] sm:$0xff]
    %v51 = vld [vmem:[#allocation5 + $0x10] sm:$0xff]
    %v52 = vld [vmem:[#allocation5 + $0x18] sm:$0xff]
    %v53 = vld [vmem:[#allocation5 + $0x20] sm:$0xff]
    %v54 = vld [vmem:[#allocation5 + $0x28] sm:$0xff]
    %v55 = vld [vmem:[#allocation5 + $0x30] sm:$0xff]
    %v56 = vld [vmem:[#allocation5 + $0x38] sm:$0xff]
    %v57 = vld [vmem:[#allocation5 + $0x40] sm:$0xff]
    %v58 = vld [vmem:[#allocation5 + $0x48] sm:$0xff]
    %v59 = vld [vmem:[#allocation5 + $0x50] sm:$0xff]
    %v60 = vld [vmem:[#allocation5 + $0x58] sm:$0xff]
    %v61 = vld [vmem:[#allocation5 + $0x60] sm:$0xff]
    %v62 = vld [vmem:[#allocation5 + $0x68] sm:$0xff]
    %v63 = vld [vmem:[#allocation5 + $0x70] sm:$0xff]
    %v64 = vld [vmem:[#allocation5 + $0x78] sm:$0xff]
    %v65 = vld [vmem:[%s2] sm:$0x1]
    %v67 = vperm.slane %v65, 0
    %69 = vmatpush.msra.mxu0 %v64
    %70 = vmatpush.msra.mxu0 %v63
    %71 = vmatpush.msra.mxu0 %v62
    %72 = vmatpush.msra.mxu0 %v61
    %73 = vmatpush.msra.mxu0 %v60
    %74 = vmatpush.msra.mxu0 %v59
    %75 = vmatpush.msra.mxu0 %v58
    %76 = vmatpush.msra.mxu0 %v57
    %77 = vmatpush.msra.mxu0 %v56
    %78 = vmatpush.msra.mxu0 %v55
    %79 = vmatpush.msra.mxu0 %v54
    %80 = vmatpush.msra.mxu0 %v53
    %81 = vmatpush.msra.mxu0 %v52
    %82 = vmatpush.msra.mxu0 %v51
    %83 = vmatpush.msra.mxu0 %v50
    %84 = vmatpush.msra.mxu0 %v49
    %85 = vmatmul.f32.gmra.mxu0 %v47
    %v86 = vpop.f32.mrf.mxu0
    %v87 = vadd.f32 %v67, %v86
    %88 = vmatmul.f32.gmra.mxu0 %v48
    %v89 = vpop.f32.mrf.mxu0
    %v90 = vadd.f32 %v67, %v89
    %91 = vdwg.mxu0
    %v92 = vadd.f32 %v87, %v47
    %v93 = vadd.f32 %v90, %v48
    %94 = vst [vmem:[#allocation7] sm:$0xff] %v92
    %95 = vst [vmem:[#allocation7 + $0x8] sm:$0xff] %v93
    // Predicated region
    $region22: #{tpu_custom_call.1} parent=1 // pred_check
      _
    $region23: #{tpu_custom_call.1} parent=1 // pred_check_branch
      %97 = sbr.rel (0) target = $region25
    $region24: #{tpu_custom_call.1} parent=1 // pred_region
      %99 = vsyncadd [#allocation4], 0
      %s100 = sshll.u32 [#allocation7], 4
      %s101 = int_to_ptr.vmem [resolvable:$true] %s100
      %s102 = sshll.u32 %s3, 4
      %s103 = int_to_ptr.hbm [resolvable:$true] %s102
      %108 = dma.vmem_to_hbm [thread:$0]  %s101, 256, %s103, [#allocation4], 128, 128, 8
    $region25: #{tpu_custom_call.1} parent=1 // pred_fallthru
      _
    // Predicated region
    $region26: #{tpu_custom_call.1} parent=1 // pred_check
      _
    $region27: #{tpu_custom_call.1} parent=1 // pred_check_branch
      %110 = sbr.rel (0) target = $region29
    $region28: #{tpu_custom_call.1} parent=1 // pred_region
      %112 = dma.done [#allocation4], 256
    $region29: #{tpu_custom_call.1} parent=1 // pred_fallthru
      _
    %113 = vsyncpa [#allocation3], 1
    %114 = vsyncpa [#allocation6], 1
    %115 = vsyncpa [#allocation4], 1

</llo_original>
